<compile_context>
chip_gen: v6e
topology: v6e:2x2x1
jax: 0.10.0
libtpu: 0.0.40
codegen_flags: <defaults>
</compile_context>

<pallas_src>
import functools

import jax
import jax.numpy as jnp
from jax.experimental import pallas as pl
from jax.experimental.pallas import tpu as pltpu

_LANE = 128  # vreg lane width


def _round_up(a: int, b: int) -> int:
    return ((a + b - 1) // b) * b


def _sublane_pack(dtype) -> int:
    # Rows per vreg: 8 for 4-byte, 16 for 2-byte, 32 for 1-byte dtypes.
    itemsize = jnp.dtype(dtype).itemsize
    return max(8, 32 // max(itemsize, 1))


def _loss_math(x_f32, beta, gamma, label_smoothing):
    # z = beta*(x - gamma/beta) = beta*x - gamma  (constants folded at trace time)
    z = beta * x_f32 - gamma
    # Numerically stable log-sigmoid: logsigmoid(z) = min(z, 0) - log1p(exp(-|z|))
    log_sig = jnp.minimum(z, 0.0) - jnp.log1p(jnp.exp(-jnp.abs(z)))
    # -(1-s)*logsig(z) - s*logsig(-z) == -logsig(z) + s*z  (exact identity)
    if label_smoothing == 0.0:
        return -log_sig
    return label_smoothing * z - log_sig


def _preference_loss_kernel(x_ref, o_ref, *, beta, gamma, label_smoothing):
    x = x_ref[...].astype(jnp.float32)
    losses = _loss_math(x, beta, gamma, label_smoothing)
    o_ref[...] = losses.astype(o_ref.dtype)


def preference_loss(pi_logratios, beta=2.0, gamma=0.5, label_smoothing=0.0,
                    *, block_rows=4096, small_n_threshold=1024):
    """SimPO preference loss per example (same semantics as PyTorch
    PreferenceLoss.forward).

    block_rows: rows (of 128 lanes) per grid step. 4096 (2 MiB f32 tiles) is a
    good default for v5e/v6e; ~8192 is worth trying on v7x (3.2 TB/s HBM) —
    in+out double-buffered that is 16 MiB, still well under the scoped limit.
    """
    x = jnp.asarray(pi_logratios)
    orig_shape = x.shape
    flat = x.reshape(-1)
    n = flat.shape[0]

    beta = float(beta)
    gamma = float(gamma)
    label_smoothing = float(label_smoothing)

    # Tiny batches: pad/launch/slice overhead dominates; plain jnp is faster
    # and XLA fuses it into a single tiny elementwise op.
    if n <= small_n_threshold:
        out = _loss_math(flat.astype(jnp.float32), beta, gamma,
                         label_smoothing).astype(x.dtype)
        return out.reshape(orig_shape)

    sub = _sublane_pack(x.dtype)

    # Pad only to one (sub x 128) tile — at most sub*128-1 extra elements.
    pad_unit = sub * _LANE
    padded_n = _round_up(n, pad_unit)
    padded_rows = padded_n // _LANE

    # Block rows: a multiple of the dtype's sublane pack, capped so the grid
    # has >= 2 steps whenever there is more than one vreg-row of work (lets
    # v7x's two TensorCores both work via the "parallel" axis).
    br = min(block_rows, padded_rows)
    if padded_rows > sub:
        br = min(br, _round_up(pl.cdiv(padded_rows, 2), sub))
    br = max(_round_up(br, sub), sub)
    br = min(br, padded_rows)

    if padded_n != n:
        flat = jnp.pad(flat, (0, padded_n - n))
    x2d = flat.reshape(padded_rows, _LANE)

    kernel = functools.partial(
        _preference_loss_kernel,
        beta=beta, gamma=gamma, label_smoothing=label_smoothing,
    )

    out2d = pl.pallas_call(
        kernel,
        out_shape=jax.ShapeDtypeStruct(x2d.shape, x.dtype),
        grid=(pl.cdiv(padded_rows, br),),   # ragged last block handled by Pallas
        in_specs=[pl.BlockSpec((br, _LANE), lambda i: (i, 0))],
        out_specs=pl.BlockSpec((br, _LANE), lambda i: (i, 0)),
        compiler_params=pltpu.CompilerParams(
            dimension_semantics=("parallel",),
            vmem_limit_bytes=32 * 1024 * 1024,
        ),
    )(x2d)

    out = out2d.reshape(-1)
    if padded_n != n:
        out = out[:n]
    return out.reshape(orig_shape)


def _reference(pi_logratios, beta=2.0, gamma=0.5, label_smoothing=0.0):
    gamma_logratios = gamma / beta
    logits = pi_logratios - gamma_logratios
    return (
        -jax.nn.log_sigmoid(beta * logits) * (1.0 - label_smoothing)
        - jax.nn.log_sigmoid(-beta * logits) * label_smoothing
    )


if __name__ == "__main__":
    beta, gamma, label_smoothing = 2.0, 0.5, 0.1

    # 1) Small batch (consistent with the module: 1-D batch vector) — fast path.
    key = jax.random.PRNGKey(0)
    batch = 8
    pi_logratios = jax.random.normal(key, (batch,), dtype=jnp.float32) * 3.0
    losses = jax.block_until_ready(
        preference_loss(pi_logratios, beta, gamma, label_smoothing))
    ref = _reference(pi_logratios, beta, gamma, label_smoothing)
    assert losses.shape == pi_logratios.shape
    assert jnp.allclose(losses, ref, atol=1e-5, rtol=1e-5), (losses, ref)

    # 2) Non-multiple-of-128 batch forced through the Pallas path
    #    (small_n_threshold=0): exercises padding + single-block grid.
    key2 = jax.random.PRNGKey(1)
    pi_logratios2 = jax.random.normal(key2, (300,), dtype=jnp.float32) * 3.0
    losses2 = jax.block_until_ready(
        preference_loss(pi_logratios2, beta, gamma, 0.0, small_n_threshold=0))
    ref2 = _reference(pi_logratios2, beta, gamma, 0.0)
    assert losses2.shape == pi_logratios2.shape
    assert jnp.allclose(losses2, ref2, atol=1e-5, rtol=1e-5), (losses2, ref2)

    # 3) Larger batch through the Pallas path: >=2-step grid with a ragged
    #    last block (padded_rows=24, br=16 -> grid=2, last block masked).
    key3 = jax.random.PRNGKey(2)
    pi_logratios3 = jax.random.normal(key3, (3000,), dtype=jnp.float32) * 3.0
    losses3 = jax.block_until_ready(
        preference_loss(pi_logratios3, beta, gamma, label_smoothing))
    ref3 = _reference(pi_logratios3, beta, gamma, label_smoothing)
    assert losses3.shape == pi_logratios3.shape
    assert jnp.allclose(losses3, ref3, atol=1e-5, rtol=1e-5), (losses3, ref3)

    print("KERNEL_OK")
</pallas_src>

<mosaic_0001>
module attributes {stable_mosaic.version = 11 : i64} {
  func.func @_preference_loss_kernel(%arg0: i32, %arg1: memref<8x128xf32, #tpu.memory_space<vmem>>, %arg2: memref<8x128xf32, #tpu.memory_space<vmem>>) attributes {dimension_semantics = [#tpu.dimension_semantics<parallel>], iteration_bounds = array<i64: 1>, scalar_prefetch = 0 : i64, scratch_operands = 0 : i64, tpu.core_type = #tpu.core_type<tc>, window_params = [{transform_indices = @transform_0, window_bounds = array<i64: 8, 128>}, {transform_indices = @transform_1, window_bounds = array<i64: 8, 128>}]} {
    %c0 = arith.constant 0 : index
    %c0_0 = arith.constant 0 : index
    %0 = vector.load %arg1[%c0, %c0_0] : memref<8x128xf32, #tpu.memory_space<vmem>>, vector<8x128xf32>
    %cst = arith.constant 2.000000e+00 : f32
    %1 = vector.broadcast %cst : f32 to vector<8x128xf32>
    %2 = arith.mulf %1, %0 : vector<8x128xf32>
    %cst_1 = arith.constant 5.000000e-01 : f32
    %3 = vector.broadcast %cst_1 : f32 to vector<8x128xf32>
    %4 = arith.subf %2, %3 : vector<8x128xf32>
    %cst_2 = arith.constant 0.000000e+00 : f32
    %5 = vector.broadcast %cst_2 : f32 to vector<8x128xf32>
    %6 = arith.minimumf %4, %5 : vector<8x128xf32>
    %7 = math.absf %4 : vector<8x128xf32>
    %cst_3 = arith.constant 0.000000e+00 : f32
    %8 = vector.broadcast %cst_3 : f32 to vector<8x128xf32>
    %9 = arith.subf %8, %7 : vector<8x128xf32>
    %10 = math.exp %9 : vector<8x128xf32>
    %11 = math.log1p %10 : vector<8x128xf32>
    %12 = arith.subf %6, %11 : vector<8x128xf32>
    %cst_4 = arith.constant 0.000000e+00 : f32
    %13 = vector.broadcast %cst_4 : f32 to vector<8x128xf32>
    %14 = arith.subf %13, %12 : vector<8x128xf32>
    %c0_5 = arith.constant 0 : index
    %c0_6 = arith.constant 0 : index
    %15 = vector.load %arg2[%c0_5, %c0_6] : memref<8x128xf32, #tpu.memory_space<vmem>>, vector<8x128xf32>
    tpu.vector_store %arg2[%c0_5, %c0_6], %14 {strides = array<i32>} : memref<8x128xf32, #tpu.memory_space<vmem>>, vector<8x128xf32>,
    return
  }
  func.func @transform_0(%arg0: i32) -> (i32, i32) {
    %c0_i32 = arith.constant 0 : i32
    %c0_i32_0 = arith.constant 0 : i32
    return %arg0, %c0_i32 : i32, i32
  }
  func.func @transform_1(%arg0: i32) -> (i32, i32) {
    %c0_i32 = arith.constant 0 : i32
    %c0_i32_0 = arith.constant 0 : i32
    return %arg0, %c0_i32 : i32, i32
  }
}

</mosaic_0001>

<llo_original>
// kernel: tpu_custom_call.1
$region0: #{tpu_custom_call.1}
  #allocation0 [shape = 'u32[]', space=smem, size = 0x4, offset = 0x4, fixed_abs, tag = 'smem constant byte address 0x4 - core index']
  #allocation1 [shape = 'u32[144,128]{1,0:T(1,128)}', space=vmem, size = 0x12000, scoped, tag = 'internal scratch']
  %s0 = inlined_call_operand.hbm [shape: f32[8,128], index: 0, kind: input, shape index: {}]
  %s1 = inlined_call_operand.hbm [shape: f32[8,128], index: 1, kind: output, shape index: {}]
  %s2 = sld [smem:[#allocation0]]
  $region18: #{tpu_custom_call.1} parent=0
    _
  %s4 = ssub.s32 1, %s2
  %s5 = scalar_select 0, %s4, %s2
  $region1: #{tpu_custom_call.1} parent=0
    #allocation2 [shape = 'u8[4096]{0}', space=vmem, size = 0x1000, scoped, tag = 'input window, operand 0, single buffered']
    #allocation3 [shape = 's32[1]{0}', space=sflag, size = 0x4, scoped, tag = 'scoped memory for tpu_custom_call.1']
    #allocation4 [shape = 's32[1]{0}', space=sflag, size = 0x4, scoped, tag = 'scoped memory for tpu_custom_call.1']
    #allocation5 [shape = 'u8[4096]{0}', space=vmem, size = 0x1000, scoped, tag = 'output window, operand 0, single buffered']
    %6 = vsyncpa [#allocation3], 0
    %7 = vsyncpa [#allocation4], 0
    // Predicated region
    $region2: #{tpu_custom_call.1} parent=1 // pred_check
      _
    $region3: #{tpu_custom_call.1} parent=1 // pred_check_branch
      %9 = sbr.rel (0) target = $region5
    $region4: #{tpu_custom_call.1} parent=1 // pred_region
      %s11 = ssub.s32 128, 128
      %12 = vsyncadd [#allocation3], %s11
      %s14 = sshll.u32 [#allocation2], 4
      %s15 = int_to_ptr.vmem [resolvable:$true] %s14
      %17 = dma.hbm_to_vmem [thread:$0]  %s0, 128, %s15, [#allocation3]
    $region5: #{tpu_custom_call.1} parent=1 // pred_fallthru
      _
    // Predicated region
    $region6: #{tpu_custom_call.1} parent=1 // pred_check
      _
    $region7: #{tpu_custom_call.1} parent=1 // pred_check_branch
      %19 = sbr.rel (0) target = $region9
    $region8: #{tpu_custom_call.1} parent=1 // pred_region
      %20 = dma.done [#allocation3], 128
    $region9: #{tpu_custom_call.1} parent=1 // pred_fallthru
      _
    %v21 = vld [vmem:[#allocation2] sm:$0xff]
    %v22 = vmul.f32 %v21, 2.0
    %v23 = vsub.f32 %v22, 0.5
    %v24 = vmin.f32 %v23, 0.0
    %v25 = vand.u32 2147483647, %v23
    %v26 = vsub.f32 0.0, %v25
    %v27 = vmul.f32 %v26, 1.442695
    %v28 = vpow.pop %v27
    %v29 = vadd.f32 %v28, 1.0
    %v30 = vlog2.pop %v29
    %v31 = vmul.f32 %v30, 0.6931472
    %v32 = vmul.f32 -0.5, %v28
    %v33 = vadd.f32 %v32, 1.0
    %v34 = vmul.f32 %v33, %v28
    %v35 = vand.u32 2147483647, %v28
    %vm36 = vcmp.lt.f32.partialorder %v35, 0.0004427343
    %v37 = vsel %vm36, %v34, %v31
    %v38 = vsub.f32 %v24, %v37
    %v39 = vsub.f32 0.0, %v38
    %40 = vst [vmem:[#allocation5] sm:$0xff] %v39
    // Predicated region
    $region10: #{tpu_custom_call.1} parent=1 // pred_check
      _
    $region11: #{tpu_custom_call.1} parent=1 // pred_check_branch
      %42 = sbr.rel (0) target = $region13
    $region12: #{tpu_custom_call.1} parent=1 // pred_region
      %s44 = ssub.s32 128, 128
      %45 = vsyncadd [#allocation4], %s44
      %s47 = sshll.u32 [#allocation5], 4
      %s48 = int_to_ptr.vmem [resolvable:$true] %s47
      %50 = dma.vmem_to_hbm [thread:$0]  %s48, 128, %s1, [#allocation4]
    $region13: #{tpu_custom_call.1} parent=1 // pred_fallthru
      _
    // Predicated region
    $region14: #{tpu_custom_call.1} parent=1 // pred_check
      _
    $region15: #{tpu_custom_call.1} parent=1 // pred_check_branch
      %52 = sbr.rel (0) target = $region17
    $region16: #{tpu_custom_call.1} parent=1 // pred_region
      %53 = dma.done [#allocation4], 128
    $region17: #{tpu_custom_call.1} parent=1 // pred_fallthru
      _
    %54 = vsyncpa [#allocation3], 1
    %55 = vsyncpa [#allocation4], 1

</llo_original>
